<compile_context>
chip_gen: v7x
topology: tpu7x:2x2x1
jax: 0.10.0
libtpu: 0.0.40
codegen_flags: <defaults>
</compile_context>

<pallas_src>
import functools
import math

import jax
import jax.numpy as jnp
from jax.experimental import pallas as pl
from jax.experimental.pallas import tpu as pltpu


def _rope_kernel(cos_ref, sina_ref, sinb_ref, x_ref, o_ref, *, half):
    # cos/sina/sinb: (1, TC) tables, broadcast over rows (sublane broadcast).
    # x/o:           (TB, TC) lane-dense blocks (TC a multiple of head_dim).
    x = x_ref[...]
    tc = x.shape[-1]
    # Partner lanes for the rotary pairs (XLU lane rotations, axis must be a
    # non-negative index for pltpu.roll; x is 2-D so the lane axis is 1):
    #   x_left[j]  = x[(j + half) % tc]  -> supplies x2 for the first half
    #   x_right[j] = x[(j - half) % tc]  -> supplies x1 for the second half
    # Any lane where the roll wraps across a seq-position chunk is multiplied
    # by zero in sin_a / sin_b, so the wrap-around values never matter.
    x_left = pltpu.roll(x, shift=tc - half, axis=1)
    x_right = pltpu.roll(x, shift=half, axis=1)
    o_ref[...] = x * cos_ref[...] + x_left * sina_ref[...] + x_right * sinb_ref[...]


def _build_tables(S, D, dims, offset, base, scale, dtype):
    """Full-width (1, S*D) cos / signed-sin tables (angles computed in fp32)."""
    half = dims // 2
    positions = jnp.arange(offset, S + offset, dtype=jnp.float32) * scale
    freqs = jnp.exp(-jnp.arange(0.0, half, dtype=jnp.float32) * (math.log(base) / half))
    theta = positions[:, None] * freqs[None, :]                  # (S, half)
    cos_t, sin_t = jnp.cos(theta), jnp.sin(theta)
    tail = D - 2 * half
    zeros_h = jnp.zeros((S, half), jnp.float32)
    zeros_t = jnp.zeros((S, tail), jnp.float32)
    ones_t = jnp.ones((S, tail), jnp.float32)
    cos_full = jnp.concatenate([cos_t, cos_t, ones_t], axis=-1)   # (S, D)
    sin_a = jnp.concatenate([-sin_t, zeros_h, zeros_t], axis=-1)  # pairs with x[j+half]
    sin_b = jnp.concatenate([zeros_h, sin_t, zeros_t], axis=-1)   # pairs with x[j-half]
    C = S * D
    return (cos_full.astype(dtype).reshape(1, C),
            sin_a.astype(dtype).reshape(1, C),
            sin_b.astype(dtype).reshape(1, C))


def _choose_tiles(R, C, D, itemsize):
    """Pick (row_tile, col_tile) targeting ~2 MiB x-blocks with valid TPU tiling."""
    target = 2 * 1024 * 1024
    row_bytes = C * itemsize
    if row_bytes * min(R, 8) <= target:
        # Whole flattened rows are cheap: keep the full lane-dense row, tile rows.
        tc = C
        tb = min(R, max(1, target // row_bytes))
        if tb < R:
            tb = max(8, (tb // 8) * 8)       # sublane-of-8 block constraint
    else:
        # A handful of rows already hits the target: also tile the seq*head_dim
        # axis. Column tiles are multiples of lcm(head_dim, 128) so each seq
        # position's head_dim chunk (and its rotary halves) stays in one block.
        unit = (D * 128) // math.gcd(D, 128)
        tb = min(R, 8)
        tc = max(unit, (target // (tb * itemsize * unit)) * unit)
        if tc >= C:
            tc = C
    return tb, tc


def rope_forward(x, dims, offset=0, base=10000.0, scale=1.0, traditional=False):
    """Pallas implementation of RoPE.forward (traditional=False path)."""
    if traditional:
        # TODO(synk): traditional (interleaved even/odd) RoPE path not implemented.
        raise NotImplementedError("traditional RoPE path not implemented")
    assert dims % 2 == 0 and 2 <= dims <= x.shape[-1]

    shape = x.shape
    S, D = shape[-2], shape[-1]
    R = int(math.prod(shape[:-2]))
    C = S * D
    xf = x.reshape(R, C)

    cos_full, sin_a, sin_b = _build_tables(S, D, dims, offset, base, scale, x.dtype)

    itemsize = jnp.dtype(x.dtype).itemsize
    tb, tc = _choose_tiles(R, C, D, itemsize)
    grid = (pl.cdiv(R, tb), pl.cdiv(C, tc))

    kernel = functools.partial(_rope_kernel, half=dims // 2)
    out = pl.pallas_call(
        kernel,
        out_shape=jax.ShapeDtypeStruct((R, C), x.dtype),
        grid=grid,
        in_specs=[
            pl.BlockSpec((1, tc), lambda i, j: (0, j)),    # cos_full
            pl.BlockSpec((1, tc), lambda i, j: (0, j)),    # sin_a
            pl.BlockSpec((1, tc), lambda i, j: (0, j)),    # sin_b
            pl.BlockSpec((tb, tc), lambda i, j: (i, j)),   # x block
        ],
        out_specs=pl.BlockSpec((tb, tc), lambda i, j: (i, j)),
        compiler_params=pltpu.CompilerParams(
            dimension_semantics=("parallel", "parallel"),
            vmem_limit_bytes=32 * 1024 * 1024,
        ),
    )(cos_full, sin_a, sin_b, xf)
    return out.reshape(shape)


def rope_reference(x, dims, offset=0, base=10000.0, scale=1.0):
    """Pure-JAX reference mirroring the PyTorch module (non-traditional path)."""
    shape = x.shape
    xr = x.reshape(-1, shape[-2], shape[-1])
    S = xr.shape[1]
    half = dims // 2
    positions = jnp.arange(offset, S + offset, dtype=jnp.float32) * scale
    freqs = jnp.exp(-jnp.arange(0.0, half, dtype=jnp.float32) * (math.log(base) / half))
    theta = positions[:, None] * freqs[None, :]
    cos = jnp.cos(theta).astype(x.dtype)
    sin = jnp.sin(theta).astype(x.dtype)
    x1 = xr[..., :half]
    x2 = xr[..., half:dims]
    rx1 = x1 * cos - x2 * sin
    rx2 = x1 * sin + x2 * cos
    if dims < xr.shape[-1]:
        rx = jnp.concatenate([rx1, rx2, xr[..., dims:]], axis=-1)
    else:
        rx = jnp.concatenate([rx1, rx2], axis=-1)
    return rx.reshape(shape)


if __name__ == "__main__":
    key = jax.random.PRNGKey(0)
    batch, n_heads, seq, head_dim = 2, 4, 8, 32
    x = jax.random.normal(key, (batch, n_heads, seq, head_dim), dtype=jnp.float32)

    # Full rotary application (dims == head_dim).
    dims_full = head_dim
    out_full = jax.block_until_ready(rope_forward(x, dims_full))
    ref_full = rope_reference(x, dims_full)
    assert out_full.shape == x.shape and out_full.dtype == x.dtype
    assert jnp.allclose(out_full, ref_full, atol=1e-5, rtol=1e-5)

    # Partial rotary application (dims < head_dim), as used in Phi.
    dims_partial = 16
    out_part = jax.block_until_ready(rope_forward(x, dims_partial, offset=2))
    ref_part = rope_reference(x, dims_partial, offset=2)
    assert jnp.allclose(out_part, ref_part, atol=1e-5, rtol=1e-5)

    print("KERNEL_OK")
</pallas_src>

<mosaic_0001>
module attributes {stable_mosaic.version = 11 : i64} {
  func.func @_rope_kernel(%arg0: i32, %arg1: i32, %arg2: memref<1x256xf32, #tpu.memory_space<vmem>>, %arg3: memref<1x256xf32, #tpu.memory_space<vmem>>, %arg4: memref<1x256xf32, #tpu.memory_space<vmem>>, %arg5: memref<8x256xf32, #tpu.memory_space<vmem>>, %arg6: memref<8x256xf32, #tpu.memory_space<vmem>>) attributes {dimension_semantics = [#tpu.dimension_semantics<parallel>, #tpu.dimension_semantics<parallel>], iteration_bounds = array<i64: 1, 1>, scalar_prefetch = 0 : i64, scratch_operands = 0 : i64, tpu.core_type = #tpu.core_type<tc>, window_params = [{transform_indices = @transform_0, window_bounds = array<i64: 1, 256>}, {transform_indices = @transform_1, window_bounds = array<i64: 1, 256>}, {transform_indices = @transform_2, window_bounds = array<i64: 1, 256>}, {transform_indices = @transform_3, window_bounds = array<i64: 8, 256>}, {transform_indices = @transform_4, window_bounds = array<i64: 8, 256>}]} {
    %c0 = arith.constant 0 : index
    %c0_0 = arith.constant 0 : index
    %0 = vector.load %arg5[%c0, %c0_0] : memref<8x256xf32, #tpu.memory_space<vmem>>, vector<8x256xf32>
    %c240_i32 = arith.constant 240 : i32
    %1 = tpu.dynamic_rotate %0 by %c240_i32 dim 1 : vector<8x256xf32>, i32 -> vector<8x256xf32>
    %c16_i32 = arith.constant 16 : i32
    %2 = tpu.dynamic_rotate %0 by %c16_i32 dim 1 : vector<8x256xf32>, i32 -> vector<8x256xf32>
    %c0_1 = arith.constant 0 : index
    %c0_2 = arith.constant 0 : index
    %3 = vector.load %arg2[%c0_1, %c0_2] : memref<1x256xf32, #tpu.memory_space<vmem>>, vector<1x256xf32>
    %4 = vector.broadcast %3 : vector<1x256xf32> to vector<8x256xf32>
    %5 = arith.mulf %0, %4 : vector<8x256xf32>
    %c0_3 = arith.constant 0 : index
    %c0_4 = arith.constant 0 : index
    %6 = vector.load %arg3[%c0_3, %c0_4] : memref<1x256xf32, #tpu.memory_space<vmem>>, vector<1x256xf32>
    %7 = vector.broadcast %6 : vector<1x256xf32> to vector<8x256xf32>
    %8 = arith.mulf %1, %7 : vector<8x256xf32>
    %9 = arith.addf %5, %8 : vector<8x256xf32>
    %c0_5 = arith.constant 0 : index
    %c0_6 = arith.constant 0 : index
    %10 = vector.load %arg4[%c0_5, %c0_6] : memref<1x256xf32, #tpu.memory_space<vmem>>, vector<1x256xf32>
    %11 = vector.broadcast %10 : vector<1x256xf32> to vector<8x256xf32>
    %12 = arith.mulf %2, %11 : vector<8x256xf32>
    %13 = arith.addf %9, %12 : vector<8x256xf32>
    %c0_7 = arith.constant 0 : index
    %c0_8 = arith.constant 0 : index
    %14 = vector.load %arg6[%c0_7, %c0_8] : memref<8x256xf32, #tpu.memory_space<vmem>>, vector<8x256xf32>
    tpu.vector_store %arg6[%c0_7, %c0_8], %13 {strides = array<i32>} : memref<8x256xf32, #tpu.memory_space<vmem>>, vector<8x256xf32>,
    return
  }
  func.func @transform_0(%arg0: i32, %arg1: i32) -> (i32, i32) {
    %c0_i32 = arith.constant 0 : i32
    %c0_i32_0 = arith.constant 0 : i32
    return %c0_i32, %arg1 : i32, i32
  }
  func.func @transform_1(%arg0: i32, %arg1: i32) -> (i32, i32) {
    %c0_i32 = arith.constant 0 : i32
    %c0_i32_0 = arith.constant 0 : i32
    return %c0_i32, %arg1 : i32, i32
  }
  func.func @transform_2(%arg0: i32, %arg1: i32) -> (i32, i32) {
    %c0_i32 = arith.constant 0 : i32
    %c0_i32_0 = arith.constant 0 : i32
    return %c0_i32, %arg1 : i32, i32
  }
  func.func @transform_3(%arg0: i32, %arg1: i32) -> (i32, i32) {
    %c0_i32 = arith.constant 0 : i32
    return %arg0, %arg1 : i32, i32
  }
  func.func @transform_4(%arg0: i32, %arg1: i32) -> (i32, i32) {
    %c0_i32 = arith.constant 0 : i32
    return %arg0, %arg1 : i32, i32
  }
}

</mosaic_0001>

<llo_original>
// kernel: tpu_custom_call.1
$region0: #{tpu_custom_call.1}
  #allocation0 [shape = 'u32[]', space=smem, size = 0x4, offset = 0x4, fixed_abs, tag = 'smem constant byte address 0x4 - core index']
  #allocation1 [shape = 'u32[144,128]{1,0:T(1,128)}', space=vmem, size = 0x12000, scoped, tag = 'internal scratch']
  %s0 = inlined_call_operand.hbm [shape: f32[1,256], index: 0, kind: input, shape index: {}]
  %s1 = inlined_call_operand.vmem [shape: f32[1,256], index: 1, kind: input, shape index: {}]
  %s2 = inlined_call_operand.vmem [shape: f32[1,256], index: 2, kind: input, shape index: {}]
  %s3 = inlined_call_operand.hbm [shape: f32[8,256], index: 3, kind: input, shape index: {}]
  %s4 = inlined_call_operand.hbm [shape: f32[8,256], index: 4, kind: output, shape index: {}]
  %s5 = sld [smem:[#allocation0]]
  $region34: #{tpu_custom_call.1} parent=0
    _
  %s7 = ssub.s32 1, %s5
  %s8 = scalar_select 0, %s7, %s5
  $region1: #{tpu_custom_call.1} parent=0
    #allocation2 [shape = 'u8[1024]{0}', space=vmem, size = 0x400, scoped, tag = 'input window, operand 0, single buffered']
    #allocation3 [shape = 's32[1]{0}', space=sflag, size = 0x4, scoped, tag = 'scoped memory for tpu_custom_call.1']
    #allocation4 [shape = 's32[1]{0}', space=sflag, size = 0x4, scoped, tag = 'scoped memory for tpu_custom_call.1']
    #allocation5 [shape = 'u8[8192]{0}', space=vmem, size = 0x2000, scoped, tag = 'input window, operand 3, single buffered']
    #allocation6 [shape = 's32[1]{0}', space=sflag, size = 0x4, scoped, tag = 'scoped memory for tpu_custom_call.1']
    #allocation7 [shape = 'u8[8192]{0}', space=vmem, size = 0x2000, scoped, tag = 'output window, operand 0, single buffered']
    %9 = vsyncpa [#allocation3], 0
    %10 = vsyncpa [#allocation6], 0
    %11 = vsyncpa [#allocation4], 0
    // Predicated region
    $region2: #{tpu_custom_call.1} parent=1 // pred_check
      _
    $region3: #{tpu_custom_call.1} parent=1 // pred_check_branch
      %13 = sbr.rel (0) target = $region5
    $region4: #{tpu_custom_call.1} parent=1 // pred_region
      %s15 = ssub.s32 32, 32
      %16 = vsyncadd [#allocation3], %s15
      %s18 = sshll.u32 [#allocation2], 4
      %s19 = int_to_ptr.vmem [resolvable:$true] %s18
      %21 = dma.hbm_to_vmem [thread:$0]  %s0, 32, %s19, [#allocation3]
    $region5: #{tpu_custom_call.1} parent=1 // pred_fallthru
      _
    // Predicated region
    $region6: #{tpu_custom_call.1} parent=1 // pred_check
      _
    $region7: #{tpu_custom_call.1} parent=1 // pred_check_branch
      %23 = sbr.rel (0) target = $region9
    $region8: #{tpu_custom_call.1} parent=1 // pred_region
      _
    $region9: #{tpu_custom_call.1} parent=1 // pred_fallthru
      _
    // Predicated region
    $region10: #{tpu_custom_call.1} parent=1 // pred_check
      _
    $region11: #{tpu_custom_call.1} parent=1 // pred_check_branch
      %25 = sbr.rel (0) target = $region13
    $region12: #{tpu_custom_call.1} parent=1 // pred_region
      _
    $region13: #{tpu_custom_call.1} parent=1 // pred_fallthru
      _
    // Predicated region
    $region14: #{tpu_custom_call.1} parent=1 // pred_check
      _
    $region15: #{tpu_custom_call.1} parent=1 // pred_check_branch
      %27 = sbr.rel (0) target = $region17
    $region16: #{tpu_custom_call.1} parent=1 // pred_region
      %s29 = ssub.s32 256, 256
      %30 = vsyncadd [#allocation6], %s29
      %s32 = sshll.u32 [#allocation5], 4
      %s33 = int_to_ptr.vmem [resolvable:$true] %s32
      %35 = dma.hbm_to_vmem [thread:$0]  %s3, 256, %s33, [#allocation6]
    $region17: #{tpu_custom_call.1} parent=1 // pred_fallthru
      _
    // Predicated region
    $region18: #{tpu_custom_call.1} parent=1 // pred_check
      _
    $region19: #{tpu_custom_call.1} parent=1 // pred_check_branch
      %37 = sbr.rel (0) target = $region21
    $region20: #{tpu_custom_call.1} parent=1 // pred_region
      %38 = dma.done [#allocation3], 32
    $region21: #{tpu_custom_call.1} parent=1 // pred_fallthru
      _
    // Predicated region
    $region22: #{tpu_custom_call.1} parent=1 // pred_check
      _
    $region23: #{tpu_custom_call.1} parent=1 // pred_check_branch
      %40 = sbr.rel (0) target = $region25
    $region24: #{tpu_custom_call.1} parent=1 // pred_region
      %41 = dma.done [#allocation6], 256
    $region25: #{tpu_custom_call.1} parent=1 // pred_fallthru
      _
    %v42 = vld [vmem:[#allocation5] sm:$0xff]
    %v43 = vld [vmem:[#allocation5 + $0x8] sm:$0xff]
    %44 = vrot.lane.b32.xlu0 %v42, 112
    %v45 = vpop.permute.xlu0 %44
    %46 = vrot.lane.b32.xlu0 %v43, 112
    %v47 = vpop.permute.xlu0 %46
    %v48 = vlaneseq
    %v49 = vand.u32 %v48, 127
    %vm50 = vcmp.lt.s32.totalorder %v49, 112
    %v51 = vsel %vm50, %v45, %v47
    %v52 = vsel %vm50, %v47, %v45
    %53 = vrot.lane.b32.xlu0 %v42, 16
    %v54 = vpop.permute.xlu0 %53
    %55 = vrot.lane.b32.xlu0 %v43, 16
    %v56 = vpop.permute.xlu0 %55
    %vm57 = vcmp.lt.s32.totalorder %v49, 16
    %v58 = vsel %vm57, %v54, %v56
    %v59 = vsel %vm57, %v56, %v54
    %v60 = vld [vmem:[#allocation2] sm:$0x3]
    %v62 = vlaneseq
    %v63 = vshrl.u32 %v62, 7
    %v64 = vsub.s32 0, %v63
    %v65 = vrot.slane %v60, %v64
    %v66 = vlaneseq
    %v67 = vshrl.u32 %v66, 7
    %v68 = vsub.s32 1, %v67
    %v69 = vrot.slane %v60, %v68
    %v72 = vmul.f32 %v42, %v65
    %v73 = vmul.f32 %v43, %v69
    %v74 = vld [vmem:[%s1] sm:$0x3]
    %v76 = vlaneseq
    %v77 = vshrl.u32 %v76, 7
    %v78 = vsub.s32 0, %v77
    %v79 = vrot.slane %v74, %v78
    %v80 = vlaneseq
    %v81 = vshrl.u32 %v80, 7
    %v82 = vsub.s32 1, %v81
    %v83 = vrot.slane %v74, %v82
    %v86 = vmul.f32 %v51, %v79
    %v87 = vmul.f32 %v52, %v83
    %v88 = vadd.f32 %v72, %v86
    %v89 = vadd.f32 %v73, %v87
    %v90 = vld [vmem:[%s2] sm:$0x3]
    %v92 = vlaneseq
    %v93 = vshrl.u32 %v92, 7
    %v94 = vsub.s32 0, %v93
    %v95 = vrot.slane %v90, %v94
    %v96 = vlaneseq
    %v97 = vshrl.u32 %v96, 7
    %v98 = vsub.s32 1, %v97
    %v99 = vrot.slane %v90, %v98
    %v102 = vmul.f32 %v59, %v95
    %v103 = vmul.f32 %v58, %v99
    %v104 = vadd.f32 %v88, %v102
    %v105 = vadd.f32 %v89, %v103
    %106 = vst [vmem:[#allocation7] sm:$0xff] %v104
    %107 = vst [vmem:[#allocation7 + $0x8] sm:$0xff] %v105
    // Predicated region
    $region26: #{tpu_custom_call.1} parent=1 // pred_check
      _
    $region27: #{tpu_custom_call.1} parent=1 // pred_check_branch
      %109 = sbr.rel (0) target = $region29
    $region28: #{tpu_custom_call.1} parent=1 // pred_region
      %s111 = ssub.s32 256, 256
      %112 = vsyncadd [#allocation4], %s111
      %s114 = sshll.u32 [#allocation7], 4
      %s115 = int_to_ptr.vmem [resolvable:$true] %s114
      %117 = dma.vmem_to_hbm [thread:$0]  %s115, 256, %s4, [#allocation4]
    $region29: #{tpu_custom_call.1} parent=1 // pred_fallthru
      _
    // Predicated region
    $region30: #{tpu_custom_call.1} parent=1 // pred_check
      _
    $region31: #{tpu_custom_call.1} parent=1 // pred_check_branch
      %119 = sbr.rel (0) target = $region33
    $region32: #{tpu_custom_call.1} parent=1 // pred_region
      %120 = dma.done [#allocation4], 256
    $region33: #{tpu_custom_call.1} parent=1 // pred_fallthru
      _
    %121 = vsyncpa [#allocation3], 1
    %122 = vsyncpa [#allocation6], 1
    %123 = vsyncpa [#allocation4], 1

</llo_original>
